<compile_context>
chip_gen: v6e
topology: v6e:2x2x1
jax: 0.10.0
libtpu: 0.0.40
codegen_flags: <defaults>
</compile_context>

<pallas_src>
import jax
import jax.numpy as jnp
from jax.experimental import pallas as pl
from jax.experimental.pallas import tpu as pltpu

# ---- hyperparameters (the reference module pulls these from globals) --------
KERNEL_NUM = 8            # Channel_out
KERNEL_SIZES = (3, 4, 5)  # Kernel_sizes
WORD2VEC_SIZE = 32        # embedding dim E
CLASS_NUM = 10
DROPOUT_P = 0.5           # inference mode -> identity
BATCH = 2
SEQ_LEN = 16


# ----------------------------- fused kernel ----------------------------------
def textcnn_fused_kernel(x_ref, w3_ref, b3_ref, w4_ref, b4_ref, w5_ref, b5_ref,
                         fcw_ref, fcb_ref, o_ref):
    """Whole forward pass for the full batch in one kernel invocation.

    x_ref:   (B, S, E)
    wK_ref:  (K*E, C)   bK_ref: (1, C)         (per conv branch K in KERNEL_SIZES)
    fcw_ref: (len(Ks)*C, CLASS_NUM)            fcb_ref: (1, CLASS_NUM)
    o_ref:   (B, CLASS_NUM)
    """
    B, S, E = x_ref.shape
    branches = (
        (KERNEL_SIZES[0], w3_ref, b3_ref),
        (KERNEL_SIZES[1], w4_ref, b4_ref),
        (KERNEL_SIZES[2], w5_ref, b5_ref),
    )
    # Hoist weight / bias loads out of the (static, unrolled) batch loop.
    loaded = [(K, w_ref[...], b_ref[...]) for K, w_ref, b_ref in branches]

    batch_feats = []
    for b in range(B):                       # B is tiny & static -> unrolled
        xb = x_ref[b]                        # (S, E)
        branch_feats = []
        for K, w, bias in loaded:
            T = S - K + 1                    # each branch pools over its OWN T
            # im2col: (T, K*E) from K shifted windows, concatenated along lanes.
            cols = jnp.concatenate([xb[k:k + T, :] for k in range(K)], axis=1)
            acc = jnp.dot(cols, w, preferred_element_type=jnp.float32)   # (T, C)
            acc = jnp.maximum(acc + bias, 0.0)                           # bias+ReLU
            branch_feats.append(jnp.max(acc, axis=0, keepdims=True))     # (1, C)
        batch_feats.append(jnp.concatenate(branch_feats, axis=1))        # (1, 3C)
    feats = jnp.concatenate(batch_feats, axis=0)                         # (B, 3C)

    # TODO(synk): dropout is identity at inference (PyTorch eval mode); no RNG mask.
    o_ref[...] = (
        jnp.dot(feats, fcw_ref[...], preferred_element_type=jnp.float32)
        + fcb_ref[...]
    )


# ----------------------------- wrapper ----------------------------------------
def cnnmodel_forward(params, x):
    """x: (B, S, E) float32 -> logits (B, CLASS_NUM)."""
    B = x.shape[0]
    vmem = pl.BlockSpec(memory_space=pltpu.MemorySpace.VMEM)
    args = [x]
    for K in KERNEL_SIZES:
        args += [params[f"conv{K}_w"], params[f"conv{K}_b"]]
    args += [params["fc1_w"], params["fc1_b"]]
    return pl.pallas_call(
        textcnn_fused_kernel,
        out_shape=jax.ShapeDtypeStruct((B, CLASS_NUM), jnp.float32),
        in_specs=[vmem] * len(args),
        out_specs=vmem,
    )(*args)


def init_params(key):
    params = {}
    ks = jax.random.split(key, 2 * len(KERNEL_SIZES) + 2)
    it = iter(ks)
    for K in KERNEL_SIZES:
        fan_in = 1 * K * WORD2VEC_SIZE
        bound = 1.0 / (fan_in ** 0.5)
        params[f"conv{K}_w"] = jax.random.uniform(
            next(it), (K * WORD2VEC_SIZE, KERNEL_NUM), jnp.float32, -bound, bound
        )
        params[f"conv{K}_b"] = jax.random.uniform(
            next(it), (1, KERNEL_NUM), jnp.float32, -bound, bound
        )
    fc_in = len(KERNEL_SIZES) * KERNEL_NUM
    bound = 1.0 / (fc_in ** 0.5)
    params["fc1_w"] = jax.random.uniform(
        next(it), (fc_in, CLASS_NUM), jnp.float32, -bound, bound
    )
    params["fc1_b"] = jax.random.uniform(
        next(it), (1, CLASS_NUM), jnp.float32, -bound, bound
    )
    return params


# ----------------------------- reference (pure JAX) ----------------------------
def _reference(params, x):
    B, S, E = x.shape
    pooled = []
    for K in KERNEL_SIZES:
        w = params[f"conv{K}_w"].reshape(K, E, KERNEL_NUM)   # (K, E, C)
        b = params[f"conv{K}_b"]
        T = S - K + 1
        acc = jnp.zeros((B, T, KERNEL_NUM), jnp.float32)
        for k in range(K):
            acc = acc + jnp.einsum("bte,ec->btc", x[:, k:k + T, :], w[k])
        acc = jnp.maximum(acc + b[None, :, :], 0.0)
        pooled.append(jnp.max(acc, axis=1))
    feats = jnp.concatenate(pooled, axis=1)
    return feats @ params["fc1_w"] + params["fc1_b"]


if __name__ == "__main__":
    key = jax.random.PRNGKey(0)
    k_param, k_x = jax.random.split(key)
    params = init_params(k_param)
    x = jax.random.normal(k_x, (BATCH, SEQ_LEN, WORD2VEC_SIZE), jnp.float32)

    out = jax.block_until_ready(cnnmodel_forward(params, x))
    ref = _reference(params, x)

    assert out.shape == (BATCH, CLASS_NUM), out.shape
    err = float(jnp.max(jnp.abs(out - ref)))
    assert err < 1e-3, f"max abs err {err}"
    print("KERNEL_OK")
</pallas_src>

<mosaic_0001>
module attributes {stable_mosaic.version = 11 : i64} {
  func.func @textcnn_fused_kernel(%arg0: memref<2x16x32xf32, #tpu.memory_space<vmem>>, %arg1: memref<96x8xf32, #tpu.memory_space<vmem>>, %arg2: memref<1x8xf32, #tpu.memory_space<vmem>>, %arg3: memref<128x8xf32, #tpu.memory_space<vmem>>, %arg4: memref<1x8xf32, #tpu.memory_space<vmem>>, %arg5: memref<160x8xf32, #tpu.memory_space<vmem>>, %arg6: memref<1x8xf32, #tpu.memory_space<vmem>>, %arg7: memref<24x10xf32, #tpu.memory_space<vmem>>, %arg8: memref<1x10xf32, #tpu.memory_space<vmem>>, %arg9: memref<2x10xf32, #tpu.memory_space<vmem>>) attributes {dimension_semantics = [], scalar_prefetch = 0 : i64, scratch_operands = 0 : i64, tpu.core_type = #tpu.core_type<tc>} {
    %c0 = arith.constant 0 : index
    %c0_0 = arith.constant 0 : index
    %0 = vector.load %arg1[%c0, %c0_0] : memref<96x8xf32, #tpu.memory_space<vmem>>, vector<96x8xf32>
    %c0_1 = arith.constant 0 : index
    %c0_2 = arith.constant 0 : index
    %1 = vector.load %arg2[%c0_1, %c0_2] : memref<1x8xf32, #tpu.memory_space<vmem>>, vector<1x8xf32>
    %c0_3 = arith.constant 0 : index
    %c0_4 = arith.constant 0 : index
    %2 = vector.load %arg3[%c0_3, %c0_4] : memref<128x8xf32, #tpu.memory_space<vmem>>, vector<128x8xf32>
    %c0_5 = arith.constant 0 : index
    %c0_6 = arith.constant 0 : index
    %3 = vector.load %arg4[%c0_5, %c0_6] : memref<1x8xf32, #tpu.memory_space<vmem>>, vector<1x8xf32>
    %c0_7 = arith.constant 0 : index
    %c0_8 = arith.constant 0 : index
    %4 = vector.load %arg5[%c0_7, %c0_8] : memref<160x8xf32, #tpu.memory_space<vmem>>, vector<160x8xf32>
    %c0_9 = arith.constant 0 : index
    %c0_10 = arith.constant 0 : index
    %5 = vector.load %arg6[%c0_9, %c0_10] : memref<1x8xf32, #tpu.memory_space<vmem>>, vector<1x8xf32>
    %c0_11 = arith.constant 0 : index
    %c0_12 = arith.constant 0 : index
    %c0_13 = arith.constant 0 : index
    %6 = vector.load %arg0[%c0_11, %c0_12, %c0_13] : memref<2x16x32xf32, #tpu.memory_space<vmem>>, vector<1x16x32xf32>
    %7 = vector.shape_cast %6 : vector<1x16x32xf32> to vector<16x32xf32>
    %8 = vector.extract_strided_slice %7 {offsets = [0, 0], sizes = [14, 32], strides = [1, 1]} : vector<16x32xf32> to vector<14x32xf32>
    %9 = vector.extract_strided_slice %7 {offsets = [1, 0], sizes = [14, 32], strides = [1, 1]} : vector<16x32xf32> to vector<14x32xf32>
    %10 = vector.extract_strided_slice %7 {offsets = [2, 0], sizes = [14, 32], strides = [1, 1]} : vector<16x32xf32> to vector<14x32xf32>
    %11 = tpu.concatenate %8, %9, %10 in 1 : vector<14x32xf32>, vector<14x32xf32>, vector<14x32xf32> -> vector<14x96xf32>
    %cst = arith.constant dense<0.000000e+00> : vector<14x8xf32>
    %12 = tpu.matmul %11, %0, %cst {dimension_numbers = #tpu.dot_dimension_numbers<[1], [0], [0], [1], [0, 0, 1, 1], [], []>} : vector<14x96xf32>, vector<96x8xf32>, vector<14x8xf32> -> vector<14x8xf32>
    %13 = vector.broadcast %1 : vector<1x8xf32> to vector<14x8xf32>
    %14 = arith.addf %12, %13 : vector<14x8xf32>
    %cst_14 = arith.constant 0.000000e+00 : f32
    %15 = vector.broadcast %cst_14 : f32 to vector<14x8xf32>
    %16 = arith.maximumf %14, %15 : vector<14x8xf32>
    %cst_15 = arith.constant dense<0xFF800000> : vector<8xf32>
    %17 = vector.multi_reduction <maximumf>, %16, %cst_15 [0] : vector<14x8xf32> to vector<8xf32>
    %18 = vector.shape_cast %17 : vector<8xf32> to vector<1x8xf32>
    %19 = vector.extract_strided_slice %7 {offsets = [0, 0], sizes = [13, 32], strides = [1, 1]} : vector<16x32xf32> to vector<13x32xf32>
    %20 = vector.extract_strided_slice %7 {offsets = [1, 0], sizes = [13, 32], strides = [1, 1]} : vector<16x32xf32> to vector<13x32xf32>
    %21 = vector.extract_strided_slice %7 {offsets = [2, 0], sizes = [13, 32], strides = [1, 1]} : vector<16x32xf32> to vector<13x32xf32>
    %22 = vector.extract_strided_slice %7 {offsets = [3, 0], sizes = [13, 32], strides = [1, 1]} : vector<16x32xf32> to vector<13x32xf32>
    %23 = tpu.concatenate %19, %20, %21, %22 in 1 : vector<13x32xf32>, vector<13x32xf32>, vector<13x32xf32>, vector<13x32xf32> -> vector<13x128xf32>
    %cst_16 = arith.constant dense<0.000000e+00> : vector<13x8xf32>
    %24 = tpu.matmul %23, %2, %cst_16 {dimension_numbers = #tpu.dot_dimension_numbers<[1], [0], [0], [1], [0, 0, 1, 1], [], []>} : vector<13x128xf32>, vector<128x8xf32>, vector<13x8xf32> -> vector<13x8xf32>
    %25 = vector.broadcast %3 : vector<1x8xf32> to vector<13x8xf32>
    %26 = arith.addf %24, %25 : vector<13x8xf32>
    %cst_17 = arith.constant 0.000000e+00 : f32
    %27 = vector.broadcast %cst_17 : f32 to vector<13x8xf32>
    %28 = arith.maximumf %26, %27 : vector<13x8xf32>
    %cst_18 = arith.constant dense<0xFF800000> : vector<8xf32>
    %29 = vector.multi_reduction <maximumf>, %28, %cst_18 [0] : vector<13x8xf32> to vector<8xf32>
    %30 = vector.shape_cast %29 : vector<8xf32> to vector<1x8xf32>
    %31 = vector.extract_strided_slice %7 {offsets = [0, 0], sizes = [12, 32], strides = [1, 1]} : vector<16x32xf32> to vector<12x32xf32>
    %32 = vector.extract_strided_slice %7 {offsets = [1, 0], sizes = [12, 32], strides = [1, 1]} : vector<16x32xf32> to vector<12x32xf32>
    %33 = vector.extract_strided_slice %7 {offsets = [2, 0], sizes = [12, 32], strides = [1, 1]} : vector<16x32xf32> to vector<12x32xf32>
    %34 = vector.extract_strided_slice %7 {offsets = [3, 0], sizes = [12, 32], strides = [1, 1]} : vector<16x32xf32> to vector<12x32xf32>
    %35 = vector.extract_strided_slice %7 {offsets = [4, 0], sizes = [12, 32], strides = [1, 1]} : vector<16x32xf32> to vector<12x32xf32>
    %36 = tpu.concatenate %31, %32, %33, %34, %35 in 1 : vector<12x32xf32>, vector<12x32xf32>, vector<12x32xf32>, vector<12x32xf32>, vector<12x32xf32> -> vector<12x160xf32>
    %cst_19 = arith.constant dense<0.000000e+00> : vector<12x8xf32>
    %37 = tpu.matmul %36, %4, %cst_19 {dimension_numbers = #tpu.dot_dimension_numbers<[1], [0], [0], [1], [0, 0, 1, 1], [], []>} : vector<12x160xf32>, vector<160x8xf32>, vector<12x8xf32> -> vector<12x8xf32>
    %38 = vector.broadcast %5 : vector<1x8xf32> to vector<12x8xf32>
    %39 = arith.addf %37, %38 : vector<12x8xf32>
    %cst_20 = arith.constant 0.000000e+00 : f32
    %40 = vector.broadcast %cst_20 : f32 to vector<12x8xf32>
    %41 = arith.maximumf %39, %40 : vector<12x8xf32>
    %cst_21 = arith.constant dense<0xFF800000> : vector<8xf32>
    %42 = vector.multi_reduction <maximumf>, %41, %cst_21 [0] : vector<12x8xf32> to vector<8xf32>
    %43 = vector.shape_cast %42 : vector<8xf32> to vector<1x8xf32>
    %44 = tpu.concatenate %18, %30, %43 in 1 : vector<1x8xf32>, vector<1x8xf32>, vector<1x8xf32> -> vector<1x24xf32>
    %c1 = arith.constant 1 : index
    %c0_22 = arith.constant 0 : index
    %c0_23 = arith.constant 0 : index
    %45 = vector.load %arg0[%c1, %c0_22, %c0_23] : memref<2x16x32xf32, #tpu.memory_space<vmem>>, vector<1x16x32xf32>
    %46 = vector.shape_cast %45 : vector<1x16x32xf32> to vector<16x32xf32>
    %47 = vector.extract_strided_slice %46 {offsets = [0, 0], sizes = [14, 32], strides = [1, 1]} : vector<16x32xf32> to vector<14x32xf32>
    %48 = vector.extract_strided_slice %46 {offsets = [1, 0], sizes = [14, 32], strides = [1, 1]} : vector<16x32xf32> to vector<14x32xf32>
    %49 = vector.extract_strided_slice %46 {offsets = [2, 0], sizes = [14, 32], strides = [1, 1]} : vector<16x32xf32> to vector<14x32xf32>
    %50 = tpu.concatenate %47, %48, %49 in 1 : vector<14x32xf32>, vector<14x32xf32>, vector<14x32xf32> -> vector<14x96xf32>
    %cst_24 = arith.constant dense<0.000000e+00> : vector<14x8xf32>
    %51 = tpu.matmul %50, %0, %cst_24 {dimension_numbers = #tpu.dot_dimension_numbers<[1], [0], [0], [1], [0, 0, 1, 1], [], []>} : vector<14x96xf32>, vector<96x8xf32>, vector<14x8xf32> -> vector<14x8xf32>
    %52 = vector.broadcast %1 : vector<1x8xf32> to vector<14x8xf32>
    %53 = arith.addf %51, %52 : vector<14x8xf32>
    %cst_25 = arith.constant 0.000000e+00 : f32
    %54 = vector.broadcast %cst_25 : f32 to vector<14x8xf32>
    %55 = arith.maximumf %53, %54 : vector<14x8xf32>
    %cst_26 = arith.constant dense<0xFF800000> : vector<8xf32>
    %56 = vector.multi_reduction <maximumf>, %55, %cst_26 [0] : vector<14x8xf32> to vector<8xf32>
    %57 = vector.shape_cast %56 : vector<8xf32> to vector<1x8xf32>
    %58 = vector.extract_strided_slice %46 {offsets = [0, 0], sizes = [13, 32], strides = [1, 1]} : vector<16x32xf32> to vector<13x32xf32>
    %59 = vector.extract_strided_slice %46 {offsets = [1, 0], sizes = [13, 32], strides = [1, 1]} : vector<16x32xf32> to vector<13x32xf32>
    %60 = vector.extract_strided_slice %46 {offsets = [2, 0], sizes = [13, 32], strides = [1, 1]} : vector<16x32xf32> to vector<13x32xf32>
    %61 = vector.extract_strided_slice %46 {offsets = [3, 0], sizes = [13, 32], strides = [1, 1]} : vector<16x32xf32> to vector<13x32xf32>
    %62 = tpu.concatenate %58, %59, %60, %61 in 1 : vector<13x32xf32>, vector<13x32xf32>, vector<13x32xf32>, vector<13x32xf32> -> vector<13x128xf32>
    %cst_27 = arith.constant dense<0.000000e+00> : vector<13x8xf32>
    %63 = tpu.matmul %62, %2, %cst_27 {dimension_numbers = #tpu.dot_dimension_numbers<[1], [0], [0], [1], [0, 0, 1, 1], [], []>} : vector<13x128xf32>, vector<128x8xf32>, vector<13x8xf32> -> vector<13x8xf32>
    %64 = vector.broadcast %3 : vector<1x8xf32> to vector<13x8xf32>
    %65 = arith.addf %63, %64 : vector<13x8xf32>
    %cst_28 = arith.constant 0.000000e+00 : f32
    %66 = vector.broadcast %cst_28 : f32 to vector<13x8xf32>
    %67 = arith.maximumf %65, %66 : vector<13x8xf32>
    %cst_29 = arith.constant dense<0xFF800000> : vector<8xf32>
    %68 = vector.multi_reduction <maximumf>, %67, %cst_29 [0] : vector<13x8xf32> to vector<8xf32>
    %69 = vector.shape_cast %68 : vector<8xf32> to vector<1x8xf32>
    %70 = vector.extract_strided_slice %46 {offsets = [0, 0], sizes = [12, 32], strides = [1, 1]} : vector<16x32xf32> to vector<12x32xf32>
    %71 = vector.extract_strided_slice %46 {offsets = [1, 0], sizes = [12, 32], strides = [1, 1]} : vector<16x32xf32> to vector<12x32xf32>
    %72 = vector.extract_strided_slice %46 {offsets = [2, 0], sizes = [12, 32], strides = [1, 1]} : vector<16x32xf32> to vector<12x32xf32>
    %73 = vector.extract_strided_slice %46 {offsets = [3, 0], sizes = [12, 32], strides = [1, 1]} : vector<16x32xf32> to vector<12x32xf32>
    %74 = vector.extract_strided_slice %46 {offsets = [4, 0], sizes = [12, 32], strides = [1, 1]} : vector<16x32xf32> to vector<12x32xf32>
    %75 = tpu.concatenate %70, %71, %72, %73, %74 in 1 : vector<12x32xf32>, vector<12x32xf32>, vector<12x32xf32>, vector<12x32xf32>, vector<12x32xf32> -> vector<12x160xf32>
    %cst_30 = arith.constant dense<0.000000e+00> : vector<12x8xf32>
    %76 = tpu.matmul %75, %4, %cst_30 {dimension_numbers = #tpu.dot_dimension_numbers<[1], [0], [0], [1], [0, 0, 1, 1], [], []>} : vector<12x160xf32>, vector<160x8xf32>, vector<12x8xf32> -> vector<12x8xf32>
    %77 = vector.broadcast %5 : vector<1x8xf32> to vector<12x8xf32>
    %78 = arith.addf %76, %77 : vector<12x8xf32>
    %cst_31 = arith.constant 0.000000e+00 : f32
    %79 = vector.broadcast %cst_31 : f32 to vector<12x8xf32>
    %80 = arith.maximumf %78, %79 : vector<12x8xf32>
    %cst_32 = arith.constant dense<0xFF800000> : vector<8xf32>
    %81 = vector.multi_reduction <maximumf>, %80, %cst_32 [0] : vector<12x8xf32> to vector<8xf32>
    %82 = vector.shape_cast %81 : vector<8xf32> to vector<1x8xf32>
    %83 = tpu.concatenate %57, %69, %82 in 1 : vector<1x8xf32>, vector<1x8xf32>, vector<1x8xf32> -> vector<1x24xf32>
    %84 = tpu.concatenate %44, %83 in 0 : vector<1x24xf32>, vector<1x24xf32> -> vector<2x24xf32>
    %c0_33 = arith.constant 0 : index
    %c0_34 = arith.constant 0 : index
    %85 = vector.load %arg7[%c0_33, %c0_34] : memref<24x10xf32, #tpu.memory_space<vmem>>, vector<24x10xf32>
    %cst_35 = arith.constant dense<0.000000e+00> : vector<2x10xf32>
    %86 = tpu.matmul %84, %85, %cst_35 {dimension_numbers = #tpu.dot_dimension_numbers<[1], [0], [0], [1], [0, 0, 1, 1], [], []>} : vector<2x24xf32>, vector<24x10xf32>, vector<2x10xf32> -> vector<2x10xf32>
    %c0_36 = arith.constant 0 : index
    %c0_37 = arith.constant 0 : index
    %87 = vector.load %arg8[%c0_36, %c0_37] : memref<1x10xf32, #tpu.memory_space<vmem>>, vector<1x10xf32>
    %88 = vector.broadcast %87 : vector<1x10xf32> to vector<2x10xf32>
    %89 = arith.addf %86, %88 : vector<2x10xf32>
    %c0_38 = arith.constant 0 : index
    %c0_39 = arith.constant 0 : index
    %90 = vector.load %arg9[%c0_38, %c0_39] : memref<2x10xf32, #tpu.memory_space<vmem>>, vector<2x10xf32>
    tpu.vector_store %arg9[%c0_38, %c0_39], %89 {strides = array<i32>} : memref<2x10xf32, #tpu.memory_space<vmem>>, vector<2x10xf32>,
    return
  }
}

</mosaic_0001>

<llo_original>
// kernel: tpu_custom_call.1
$region0: #{tpu_custom_call.1}
  #allocation0 [shape = 'u32[]', space=smem, size = 0x4, offset = 0x4, fixed_abs, tag = 'smem constant byte address 0x4 - core index']
  #allocation1 [shape = 'u32[144,128]{1,0:T(1,128)}', space=vmem, size = 0x12000, scoped, tag = 'internal scratch']
  %s0 = inlined_call_operand.vmem [shape: f32[2,16,32], index: 0, kind: input, shape index: {}]
  %s1 = inlined_call_operand.vmem [shape: f32[96,8], index: 1, kind: input, shape index: {}]
  %s2 = inlined_call_operand.vmem [shape: f32[1,8], index: 2, kind: input, shape index: {}]
  %s3 = inlined_call_operand.vmem [shape: f32[128,8], index: 3, kind: input, shape index: {}]
  %s4 = inlined_call_operand.vmem [shape: f32[1,8], index: 4, kind: input, shape index: {}]
  %s5 = inlined_call_operand.vmem [shape: f32[160,8], index: 5, kind: input, shape index: {}]
  %s6 = inlined_call_operand.vmem [shape: f32[1,8], index: 6, kind: input, shape index: {}]
  %s7 = inlined_call_operand.vmem [shape: f32[24,10], index: 7, kind: input, shape index: {}]
  %s8 = inlined_call_operand.vmem [shape: f32[1,10], index: 8, kind: input, shape index: {}]
  %s9 = inlined_call_operand.hbm [shape: f32[2,10], index: 9, kind: output, shape index: {}]
  %s10 = sld [smem:[#allocation0]]
  $region46: #{tpu_custom_call.1} parent=0
    _
  %s12 = ssub.s32 1, %s10
  %s13 = scalar_select 0, %s12, %s10
  $region1: #{tpu_custom_call.1} parent=0
    #allocation2 [shape = 'u8[1024]{0}', space=vmem, size = 0x400, scoped, tag = 'output window, operand 0, single buffered']
    #allocation3 [shape = 's32[1]{0}', space=sflag, size = 0x4, scoped, tag = 'scoped memory for tpu_custom_call.1']
    %14 = vsyncpa [#allocation3], 0
    // Predicated region
    $region2: #{tpu_custom_call.1} parent=1 // pred_check
      _
    $region3: #{tpu_custom_call.1} parent=1 // pred_check_branch
      %16 = sbr.rel (0) target = $region5
    $region4: #{tpu_custom_call.1} parent=1 // pred_region
      _
    $region5: #{tpu_custom_call.1} parent=1 // pred_fallthru
      _
    // Predicated region
    $region6: #{tpu_custom_call.1} parent=1 // pred_check
      _
    $region7: #{tpu_custom_call.1} parent=1 // pred_check_branch
      %18 = sbr.rel (0) target = $region9
    $region8: #{tpu_custom_call.1} parent=1 // pred_region
      _
    $region9: #{tpu_custom_call.1} parent=1 // pred_fallthru
      _
    // Predicated region
    $region10: #{tpu_custom_call.1} parent=1 // pred_check
      _
    $region11: #{tpu_custom_call.1} parent=1 // pred_check_branch
      %20 = sbr.rel (0) target = $region13
    $region12: #{tpu_custom_call.1} parent=1 // pred_region
      _
    $region13: #{tpu_custom_call.1} parent=1 // pred_fallthru
      _
    // Predicated region
    $region14: #{tpu_custom_call.1} parent=1 // pred_check
      _
    $region15: #{tpu_custom_call.1} parent=1 // pred_check_branch
      %22 = sbr.rel (0) target = $region17
    $region16: #{tpu_custom_call.1} parent=1 // pred_region
      _
    $region17: #{tpu_custom_call.1} parent=1 // pred_fallthru
      _
    // Predicated region
    $region18: #{tpu_custom_call.1} parent=1 // pred_check
      _
    $region19: #{tpu_custom_call.1} parent=1 // pred_check_branch
      %24 = sbr.rel (0) target = $region21
    $region20: #{tpu_custom_call.1} parent=1 // pred_region
      _
    $region21: #{tpu_custom_call.1} parent=1 // pred_fallthru
      _
    // Predicated region
    $region22: #{tpu_custom_call.1} parent=1 // pred_check
      _
    $region23: #{tpu_custom_call.1} parent=1 // pred_check_branch
      %26 = sbr.rel (0) target = $region25
    $region24: #{tpu_custom_call.1} parent=1 // pred_region
      _
    $region25: #{tpu_custom_call.1} parent=1 // pred_fallthru
      _
    // Predicated region
    $region26: #{tpu_custom_call.1} parent=1 // pred_check
      _
    $region27: #{tpu_custom_call.1} parent=1 // pred_check_branch
      %28 = sbr.rel (0) target = $region29
    $region28: #{tpu_custom_call.1} parent=1 // pred_region
      _
    $region29: #{tpu_custom_call.1} parent=1 // pred_fallthru
      _
    // Predicated region
    $region30: #{tpu_custom_call.1} parent=1 // pred_check
      _
    $region31: #{tpu_custom_call.1} parent=1 // pred_check_branch
      %30 = sbr.rel (0) target = $region33
    $region32: #{tpu_custom_call.1} parent=1 // pred_region
      _
    $region33: #{tpu_custom_call.1} parent=1 // pred_fallthru
      _
    // Predicated region
    $region34: #{tpu_custom_call.1} parent=1 // pred_check
      _
    $region35: #{tpu_custom_call.1} parent=1 // pred_check_branch
      %32 = sbr.rel (0) target = $region37
    $region36: #{tpu_custom_call.1} parent=1 // pred_region
      _
    $region37: #{tpu_custom_call.1} parent=1 // pred_fallthru
      _
    %v33 = vld [vmem:[%s1] sm:$0xff]
    %v34 = vld [vmem:[%s1 + $0x8] sm:$0xff]
    %v35 = vld [vmem:[%s1 + $0x10] sm:$0xff]
    %v36 = vld [vmem:[%s1 + $0x18] sm:$0xff]
    %v37 = vld [vmem:[%s1 + $0x20] sm:$0xff]
    %v38 = vld [vmem:[%s1 + $0x28] sm:$0xff]
    %v39 = vld [vmem:[%s1 + $0x30] sm:$0xff]
    %v40 = vld [vmem:[%s1 + $0x38] sm:$0xff]
    %v41 = vld [vmem:[%s1 + $0x40] sm:$0xff]
    %v42 = vld [vmem:[%s1 + $0x48] sm:$0xff]
    %v43 = vld [vmem:[%s1 + $0x50] sm:$0xff]
    %v44 = vld [vmem:[%s1 + $0x58] sm:$0xff]
    %v45 = vld [vmem:[%s2] sm:$0x1]
    %v46 = vld [vmem:[%s3] sm:$0xff]
    %v47 = vld [vmem:[%s3 + $0x8] sm:$0xff]
    %v48 = vld [vmem:[%s3 + $0x10] sm:$0xff]
    %v49 = vld [vmem:[%s3 + $0x18] sm:$0xff]
    %v50 = vld [vmem:[%s3 + $0x20] sm:$0xff]
    %v51 = vld [vmem:[%s3 + $0x28] sm:$0xff]
    %v52 = vld [vmem:[%s3 + $0x30] sm:$0xff]
    %v53 = vld [vmem:[%s3 + $0x38] sm:$0xff]
    %v54 = vld [vmem:[%s3 + $0x40] sm:$0xff]
    %v55 = vld [vmem:[%s3 + $0x48] sm:$0xff]
    %v56 = vld [vmem:[%s3 + $0x50] sm:$0xff]
    %v57 = vld [vmem:[%s3 + $0x58] sm:$0xff]
    %v58 = vld [vmem:[%s3 + $0x60] sm:$0xff]
    %v59 = vld [vmem:[%s3 + $0x68] sm:$0xff]
    %v60 = vld [vmem:[%s3 + $0x70] sm:$0xff]
    %v61 = vld [vmem:[%s3 + $0x78] sm:$0xff]
    %v62 = vld [vmem:[%s4] sm:$0x1]
    %v63 = vld [vmem:[%s5] sm:$0xff]
    %v64 = vld [vmem:[%s5 + $0x8] sm:$0xff]
    %v65 = vld [vmem:[%s5 + $0x10] sm:$0xff]
    %v66 = vld [vmem:[%s5 + $0x18] sm:$0xff]
    %v67 = vld [vmem:[%s5 + $0x20] sm:$0xff]
    %v68 = vld [vmem:[%s5 + $0x28] sm:$0xff]
    %v69 = vld [vmem:[%s5 + $0x30] sm:$0xff]
    %v70 = vld [vmem:[%s5 + $0x38] sm:$0xff]
    %v71 = vld [vmem:[%s5 + $0x40] sm:$0xff]
    %v72 = vld [vmem:[%s5 + $0x48] sm:$0xff]
    %v73 = vld [vmem:[%s5 + $0x50] sm:$0xff]
    %v74 = vld [vmem:[%s5 + $0x58] sm:$0xff]
    %v75 = vld [vmem:[%s5 + $0x60] sm:$0xff]
    %v76 = vld [vmem:[%s5 + $0x68] sm:$0xff]
    %v77 = vld [vmem:[%s5 + $0x70] sm:$0xff]
    %v78 = vld [vmem:[%s5 + $0x78] sm:$0xff]
    %v79 = vld [vmem:[%s5 + $0x80] sm:$0xff]
    %v80 = vld [vmem:[%s5 + $0x88] sm:$0xff]
    %v81 = vld [vmem:[%s5 + $0x90] sm:$0xff]
    %v82 = vld [vmem:[%s5 + $0x98] sm:$0xff]
    %v83 = vld [vmem:[%s6] sm:$0x1]
    %v84 = vld [vmem:[%s0] sm:$0xff]
    %v85 = vld [vmem:[%s0 + $0x8] sm:$0xff]
    %vm88 = vcmask 1046528
    %v89 = vrot.slane %v84, 1
    %v90 = vrot.slane %v85, 1
    %v91 = vsel %vm88, %v89, %v90
    %92 = vrot.lane.b32.xlu0 %v91, 32
    %v93 = vpop.permute.xlu0 %92
    %94 = vrot.lane.b32.xlu0 %v90, 32
    %v95 = vpop.permute.xlu0 %94
    %vm98 = vcmask 1045504
    %v99 = vrot.slane %v84, 2
    %v100 = vrot.slane %v85, 2
    %v101 = vsel %vm98, %v99, %v100
    %102 = vrot.lane.b32.xlu0 %v101, 64
    %v103 = vpop.permute.xlu0 %102
    %104 = vrot.lane.b32.xlu0 %v100, 64
    %v105 = vpop.permute.xlu0 %104
    %vm108 = vcmask 261120
    %v109 = vsel %vm108, %v84, %v93
    %v110 = vsel %vm108, %v85, %v95
    %vm111 = vcmask 523264
    %v112 = vsel %vm111, %v109, %v103
    %v113 = vsel %vm111, %v110, %v105
    %v115 = vlaneseq
    %v116 = vshrl.u32 %v115, 7
    %v117 = vsub.s32 0, %v116
    %v118 = vrot.slane %v45, %v117
    %vm120 = vcmask 785408
    %v122 = vsel %vm120, %v112, 0
    %v125 = vsel %vm120, %v113, 0
    %127 = vmatprep.subr.mxu0 0.0
    %128 = vmatpush1.msra.mxu0 0.0
    %129 = vmatprep.subr.mxu0 0.0
    %130 = vmatpush1.msra.mxu0 0.0
    %131 = vmatprep.subr.mxu0 0.0
    %132 = vmatpush1.msra.mxu0 0.0
    %133 = vmatprep.subr.mxu0 0.0
    %134 = vmatpush1.msra.mxu0 0.0
    %135 = vmatprep.subr.mxu0 0.0
    %136 = vmatpush1.msra.mxu0 %v44
    %137 = vmatprep.subr.mxu0 0.0
    %138 = vmatpush1.msra.mxu0 %v43
    %139 = vmatprep.subr.mxu0 0.0
    %140 = vmatpush1.msra.mxu0 %v42
    %141 = vmatprep.subr.mxu0 0.0
    %142 = vmatpush1.msra.mxu0 %v41
    %143 = vmatprep.subr.mxu0 0.0
    %144 = vmatpush1.msra.mxu0 %v40
    %145 = vmatprep.subr.mxu0 0.0
    %146 = vmatpush1.msra.mxu0 %v39
    %147 = vmatprep.subr.mxu0 0.0
    %148 = vmatpush1.msra.mxu0 %v38
    %149 = vmatprep.subr.mxu0 0.0
    %150 = vmatpush1.msra.mxu0 %v37
    %151 = vmatprep.subr.mxu0 0.0
    %152 = vmatpush1.msra.mxu0 %v36
    %153 = vmatprep.subr.mxu0 0.0
    %154 = vmatpush1.msra.mxu0 %v35
    %155 = vmatprep.subr.mxu0 0.0
    %156 = vmatpush1.msra.mxu0 %v34
    %157 = vmatprep.subr.mxu0 0.0
    %158 = vmatpush1.msra.mxu0 %v33
    %159 = vmatprep.subr.mxu0 0.0
    %160 = vmatpush2.msra.mxu0 0.0
    %161 = vmatprep.subr.mxu0 0.0
    %162 = vmatpush2.msra.mxu0 0.0
    %163 = vmatprep.subr.mxu0 0.0
    %164 = vmatpush2.msra.mxu0 0.0
    %165 = vmatprep.subr.mxu0 0.0
    %166 = vmatpush2.msra.mxu0 0.0
    %167 = vmatprep.subr.mxu0 0.0
    %168 = vmatpush2.msra.mxu0 0.0
    %169 = vmatprep.subr.mxu0 0.0
    %170 = vmatpush2.msra.mxu0 0.0
    %171 = vmatprep.subr.mxu0 0.0
    %172 = vmatpush2.msra.mxu0 0.0
    %173 = vmatprep.subr.mxu0 0.0
    %174 = vmatpush2.msra.mxu0 0.0
    %175 = vmatprep.subr.mxu0 0.0
    %176 = vmatpush2.msra.mxu0 0.0
    %177 = vmatprep.subr.mxu0 0.0
    %178 = vmatpush2.msra.mxu0 0.0
    %179 = vmatprep.subr.mxu0 0.0
    %180 = vmatpush2.msra.mxu0 0.0
    %181 = vmatprep.subr.mxu0 0.0
    %182 = vmatpush2.msra.mxu0 0.0
    %183 = vmatprep.subr.mxu0 0.0
    %184 = vmatpush2.msra.mxu0 0.0
    %185 = vmatprep.subr.mxu0 0.0
    %186 = vmatpush2.msra.mxu0 0.0
    %187 = vmatprep.subr.mxu0 0.0
    %188 = vmatpush2.msra.mxu0 0.0
    %189 = vmatprep.subr.mxu0 0.0
    %190 = vmatpush2.msra.mxu0 0.0
    %191 = vmatprep.mubr.f32.mxu0 0.0
    %192 = vmatmul.mubr.f32.gmra.mxu0 %v122
    %v193 = vpop.f32.mrf.mxu0
    %v194 = vadd.f32 %v118, %v193
    %v195 = vpop.f32.mrf.mxu0
    %196 = vmatprep.mubr.f32.mxu0 0.0
    %197 = vmatmul.mubr.f32.gmra.mxu0 %v125
    %v198 = vpop.f32.mrf.mxu0
    %v199 = vadd.f32 %v118, %v198
    %v200 = vpop.f32.mrf.mxu0
    %201 = vdwg.mxu0
    %v202 = vmax.f32 %v194, 0.0
    %v203 = vmax.f32 %v199, 0.0
    %vm204 = vcmask 64512
    %v205 = vsel %vm204, %v202, -inf
    %vm206 = vcmask 62464
    %v207 = vsel %vm206, %v203, -inf
    %v208 = vmax.f32 %v205, %v207
    %v209 = vrot.slane %v208, 4
    %v210 = vmax.f32 %v208, %v209
    %v211 = vrot.slane %v210, 2
    %v212 = vmax.f32 %v210, %v211
    %v213 = vrot.slane %v212, 1
    %v214 = vmax.f32 %v212, %v213
    %vm215 = vcmask 1044480
    %v216 = vrot.slane %v84, 3
    %v217 = vrot.slane %v85, 3
    %v218 = vsel %vm215, %v216, %v217
    %219 = vrot.lane.b32.xlu0 %v218, 96
    %v220 = vpop.permute.xlu0 %219
    %221 = vrot.lane.b32.xlu0 %v217, 96
    %v222 = vpop.permute.xlu0 %221
    %v225 = vsel %vm120, %v112, %v220
    %v226 = vsel %vm120, %v113, %v222
    %v228 = vlaneseq
    %v229 = vshrl.u32 %v228, 7
    %v230 = vsub.s32 0, %v229
    %v231 = vrot.slane %v62, %v230
    %233 = vmatprep.subr.mxu0 0.0
    %234 = vmatpush1.msra.mxu0 %v61
    %235 = vmatprep.subr.mxu0 0.0
    %236 = vmatpush1.msra.mxu0 %v60
    %237 = vmatprep.subr.mxu0 0.0
    %238 = vmatpush1.msra.mxu0 %v59
    %239 = vmatprep.subr.mxu0 0.0
    %240 = vmatpush1.msra.mxu0 %v58
    %241 = vmatprep.subr.mxu0 0.0
    %242 = vmatpush1.msra.mxu0 %v57
    %243 = vmatprep.subr.mxu0 0.0
    %244 = vmatpush1.msra.mxu0 %v56
    %245 = vmatprep.subr.mxu0 0.0
    %246 = vmatpush1.msra.mxu0 %v55
    %247 = vmatprep.subr.mxu0 0.0
    %248 = vmatpush1.msra.mxu0 %v54
    %249 = vmatprep.subr.mxu0 0.0
    %250 = vmatpush1.msra.mxu0 %v53
    %251 = vmatprep.subr.mxu0 0.0
    %252 = vmatpush1.msra.mxu0 %v52
    %253 = vmatprep.subr.mxu0 0.0
    %254 = vmatpush1.msra.mxu0 %v51
    %255 = vmatprep.subr.mxu0 0.0
    %256 = vmatpush1.msra.mxu0 %v50
    %257 = vmatprep.subr.mxu0 0.0
    %258 = vmatpush1.msra.mxu0 %v49
    %259 = vmatprep.subr.mxu0 0.0
    %260 = vmatpush1.msra.mxu0 %v48
    %261 = vmatprep.subr.mxu0 0.0
    %262 = vmatpush1.msra.mxu0 %v47
    %263 = vmatprep.subr.mxu0 0.0
    %264 = vmatpush1.msra.mxu0 %v46
    %265 = vmatprep.subr.mxu0 0.0
    %266 = vmatpush2.msra.mxu0 0.0
    %267 = vmatprep.subr.mxu0 0.0
    %268 = vmatpush2.msra.mxu0 0.0
    %269 = vmatprep.subr.mxu0 0.0
    %270 = vmatpush2.msra.mxu0 0.0
    %271 = vmatprep.subr.mxu0 0.0
    %272 = vmatpush2.msra.mxu0 0.0
    %273 = vmatprep.subr.mxu0 0.0
    %274 = vmatpush2.msra.mxu0 0.0
    %275 = vmatprep.subr.mxu0 0.0
    %276 = vmatpush2.msra.mxu0 0.0
    %277 = vmatprep.subr.mxu0 0.0
    %278 = vmatpush2.msra.mxu0 0.0
    %279 = vmatprep.subr.mxu0 0.0
    %280 = vmatpush2.msra.mxu0 0.0
    %281 = vmatprep.subr.mxu0 0.0
    %282 = vmatpush2.msra.mxu0 0.0
    %283 = vmatprep.subr.mxu0 0.0
    %284 = vmatpush2.msra.mxu0 0.0
    %285 = vmatprep.subr.mxu0 0.0
    %286 = vmatpush2.msra.mxu0 0.0
    %287 = vmatprep.subr.mxu0 0.0
    %288 = vmatpush2.msra.mxu0 0.0
    %289 = vmatprep.subr.mxu0 0.0
    %290 = vmatpush2.msra.mxu0 0.0
    %291 = vmatprep.subr.mxu0 0.0
    %292 = vmatpush2.msra.mxu0 0.0
    %293 = vmatprep.subr.mxu0 0.0
    %294 = vmatpush2.msra.mxu0 0.0
    %295 = vmatprep.subr.mxu0 0.0
    %296 = vmatpush2.msra.mxu0 0.0
    %297 = vmatprep.mubr.f32.mxu0 0.0
    %298 = vmatmul.mubr.f32.gmra.mxu0 %v225
    %v299 = vpop.f32.mrf.mxu0
    %v300 = vadd.f32 %v231, %v299
    %v301 = vpop.f32.mrf.mxu0
    %302 = vmatprep.mubr.f32.mxu0 0.0
    %303 = vmatmul.mubr.f32.gmra.mxu0 %v226
    %v304 = vpop.f32.mrf.mxu0
    %v305 = vadd.f32 %v231, %v304
    %v306 = vpop.f32.mrf.mxu0
    %307 = vdwg.mxu0
    %v308 = vmax.f32 %v300, 0.0
    %v309 = vmax.f32 %v305, 0.0
    %v310 = vsel %vm204, %v308, -inf
    %vm311 = vcmask 61440
    %v312 = vsel %vm311, %v309, -inf
    %v313 = vmax.f32 %v310, %v312
    %v314 = vrot.slane %v313, 4
    %v315 = vmax.f32 %v313, %v314
    %v316 = vrot.slane %v315, 2
    %v317 = vmax.f32 %v315, %v316
    %v318 = vrot.slane %v317, 1
    %v319 = vmax.f32 %v317, %v318
    %vm320 = vcmask 1043456
    %v321 = vrot.slane %v84, 4
    %v322 = vrot.slane %v85, 4
    %v323 = vsel %vm320, %v321, %v322
    %v325 = vlaneseq
    %v326 = vshrl.u32 %v325, 7
    %v327 = vsub.s32 0, %v326
    %v328 = vrot.slane %v83, %v327
    %v330 = vsel %vm108, %v323, 0
    %v332 = vsel %vm108, %v322, 0
    %334 = vmatprep.subr.mxu0 0.0
    %335 = vmatpush1.msra.mxu0 %v78
    %336 = vmatprep.subr.mxu0 0.0
    %337 = vmatpush1.msra.mxu0 %v77
    %338 = vmatprep.subr.mxu0 0.0
    %339 = vmatpush1.msra.mxu0 %v76
    %340 = vmatprep.subr.mxu0 0.0
    %341 = vmatpush1.msra.mxu0 %v75
    %342 = vmatprep.subr.mxu0 0.0
    %343 = vmatpush1.msra.mxu0 %v74
    %344 = vmatprep.subr.mxu0 0.0
    %345 = vmatpush1.msra.mxu0 %v73
    %346 = vmatprep.subr.mxu0 0.0
    %347 = vmatpush1.msra.mxu0 %v72
    %348 = vmatprep.subr.mxu0 0.0
    %349 = vmatpush1.msra.mxu0 %v71
    %350 = vmatprep.subr.mxu0 0.0
    %351 = vmatpush1.msra.mxu0 %v70
    %352 = vmatprep.subr.mxu0 0.0
    %353 = vmatpush1.msra.mxu0 %v69
    %354 = vmatprep.subr.mxu0 0.0
    %355 = vmatpush1.msra.mxu0 %v68
    %356 = vmatprep.subr.mxu0 0.0
    %357 = vmatpush1.msra.mxu0 %v67
    %358 = vmatprep.subr.mxu0 0.0
    %359 = vmatpush1.msra.mxu0 %v66
    %360 = vmatprep.subr.mxu0 0.0
    %361 = vmatpush1.msra.mxu0 %v65
    %362 = vmatprep.subr.mxu0 0.0
    %363 = vmatpush1.msra.mxu0 %v64
    %364 = vmatprep.subr.mxu0 0.0
    %365 = vmatpush1.msra.mxu0 %v63
    %366 = vmatprep.subr.mxu0 0.0
    %367 = vmatpush2.msra.mxu0 0.0
    %368 = vmatprep.subr.mxu0 0.0
    %369 = vmatpush2.msra.mxu0 0.0
    %370 = vmatprep.subr.mxu0 0.0
    %371 = vmatpush2.msra.mxu0 0.0
    %372 = vmatprep.subr.mxu0 0.0
    %373 = vmatpush2.msra.mxu0 0.0
    %374 = vmatprep.subr.mxu0 0.0
    %375 = vmatpush2.msra.mxu0 0.0
    %376 = vmatprep.subr.mxu0 0.0
    %377 = vmatpush2.msra.mxu0 0.0
    %378 = vmatprep.subr.mxu0 0.0
    %379 = vmatpush2.msra.mxu0 0.0
    %380 = vmatprep.subr.mxu0 0.0
    %381 = vmatpush2.msra.mxu0 0.0
    %382 = vmatprep.subr.mxu0 0.0
    %383 = vmatpush2.msra.mxu0 0.0
    %384 = vmatprep.subr.mxu0 0.0
    %385 = vmatpush2.msra.mxu0 0.0
    %386 = vmatprep.subr.mxu0 0.0
    %387 = vmatpush2.msra.mxu0 0.0
    %388 = vmatprep.subr.mxu0 0.0
    %389 = vmatpush2.msra.mxu0 0.0
    %390 = vmatprep.subr.mxu0 0.0
    %391 = vmatpush2.msra.mxu0 %v82
    %392 = vmatprep.subr.mxu0 0.0
    %393 = vmatpush2.msra.mxu0 %v81
    %394 = vmatprep.subr.mxu0 0.0
    %395 = vmatpush2.msra.mxu0 %v80
    %396 = vmatprep.subr.mxu0 0.0
    %397 = vmatpush2.msra.mxu0 %v79
    %398 = vmatprep.mubr.f32.mxu0 %v330
    %399 = vmatmul.mubr.f32.gmra.mxu0 %v225
    %v400 = vpop.f32.mrf.mxu0
    %v401 = vadd.f32 %v328, %v400
    %v402 = vpop.f32.mrf.mxu0
    %403 = vmatprep.mubr.f32.mxu0 %v332
    %404 = vmatmul.mubr.f32.gmra.mxu0 %v226
    %v405 = vpop.f32.mrf.mxu0
    %v406 = vadd.f32 %v328, %v405
    %v407 = vpop.f32.mrf.mxu0
    %408 = vdwg.mxu0
    %v409 = vmax.f32 %v401, 0.0
    %v410 = vmax.f32 %v406, 0.0
    %v411 = vsel %vm204, %v409, -inf
    %vm412 = vcmask 60416
    %v413 = vsel %vm412, %v410, -inf
    %v414 = vmax.f32 %v411, %v413
    %v415 = vrot.slane %v414, 4
    %v416 = vmax.f32 %v414, %v415
    %v417 = vrot.slane %v416, 2
    %v418 = vmax.f32 %v416, %v417
    %v419 = vrot.slane %v418, 1
    %v420 = vmax.f32 %v418, %v419
    %422 = vrot.lane.b32.xlu0 %v319, 8
    %v423 = vpop.permute.xlu0 %422
    %426 = vrot.lane.b32.xlu0 %v420, 16
    %v427 = vpop.permute.xlu0 %426
    %v429 = vsel %vm204, %v214, %v423
    %vm430 = vcmask 130048
    %v431 = vsel %vm430, %v429, %v427
    %s432 = scalar_lea.vmem %s0, 16
    %v433 = vld [vmem:[%s432] sm:$0xff]
    %v434 = vld [vmem:[%s432 + $0x8] sm:$0xff]
    %v437 = vrot.slane %v433, 1
    %v438 = vrot.slane %v434, 1
    %v439 = vsel %vm88, %v437, %v438
    %440 = vrot.lane.b32.xlu0 %v439, 32
    %v441 = vpop.permute.xlu0 %440
    %442 = vrot.lane.b32.xlu0 %v438, 32
    %v443 = vpop.permute.xlu0 %442
    %v446 = vrot.slane %v433, 2
    %v447 = vrot.slane %v434, 2
    %v448 = vsel %vm98, %v446, %v447
    %449 = vrot.lane.b32.xlu0 %v448, 64
    %v450 = vpop.permute.xlu0 %449
    %451 = vrot.lane.b32.xlu0 %v447, 64
    %v452 = vpop.permute.xlu0 %451
    %v455 = vsel %vm108, %v433, %v441
    %v456 = vsel %vm108, %v434, %v443
    %v457 = vsel %vm111, %v455, %v450
    %v458 = vsel %vm111, %v456, %v452
    %v460 = vsel %vm120, %v457, 0
    %v463 = vsel %vm120, %v458, 0
    %465 = vmatprep.subr.mxu0 0.0
    %466 = vmatpush1.msra.mxu0 0.0
    %467 = vmatprep.subr.mxu0 0.0
    %468 = vmatpush1.msra.mxu0 0.0
    %469 = vmatprep.subr.mxu0 0.0
    %470 = vmatpush1.msra.mxu0 0.0
    %471 = vmatprep.subr.mxu0 0.0
    %472 = vmatpush1.msra.mxu0 0.0
    %473 = vmatprep.subr.mxu0 0.0
    %474 = vmatpush1.msra.mxu0 %v44
    %475 = vmatprep.subr.mxu0 0.0
    %476 = vmatpush1.msra.mxu0 %v43
    %477 = vmatprep.subr.mxu0 0.0
    %478 = vmatpush1.msra.mxu0 %v42
    %479 = vmatprep.subr.mxu0 0.0
    %480 = vmatpush1.msra.mxu0 %v41
    %481 = vmatprep.subr.mxu0 0.0
    %482 = vmatpush1.msra.mxu0 %v40
    %483 = vmatprep.subr.mxu0 0.0
    %484 = vmatpush1.msra.mxu0 %v39
    %485 = vmatprep.subr.mxu0 0.0
    %486 = vmatpush1.msra.mxu0 %v38
    %487 = vmatprep.subr.mxu0 0.0
    %488 = vmatpush1.msra.mxu0 %v37
    %489 = vmatprep.subr.mxu0 0.0
    %490 = vmatpush1.msra.mxu0 %v36
    %491 = vmatprep.subr.mxu0 0.0
    %492 = vmatpush1.msra.mxu0 %v35
    %493 = vmatprep.subr.mxu0 0.0
    %494 = vmatpush1.msra.mxu0 %v34
    %495 = vmatprep.subr.mxu0 0.0
    %496 = vmatpush1.msra.mxu0 %v33
    %497 = vmatprep.subr.mxu0 0.0
    %498 = vmatpush2.msra.mxu0 0.0
    %499 = vmatprep.subr.mxu0 0.0
    %500 = vmatpush2.msra.mxu0 0.0
    %501 = vmatprep.subr.mxu0 0.0
    %502 = vmatpush2.msra.mxu0 0.0
    %503 = vmatprep.subr.mxu0 0.0
    %504 = vmatpush2.msra.mxu0 0.0
    %505 = vmatprep.subr.mxu0 0.0
    %506 = vmatpush2.msra.mxu0 0.0
    %507 = vmatprep.subr.mxu0 0.0
    %508 = vmatpush2.msra.mxu0 0.0
    %509 = vmatprep.subr.mxu0 0.0
    %510 = vmatpush2.msra.mxu0 0.0
    %511 = vmatprep.subr.mxu0 0.0
    %512 = vmatpush2.msra.mxu0 0.0
    %513 = vmatprep.subr.mxu0 0.0
    %514 = vmatpush2.msra.mxu0 0.0
    %515 = vmatprep.subr.mxu0 0.0
    %516 = vmatpush2.msra.mxu0 0.0
    %517 = vmatprep.subr.mxu0 0.0
    %518 = vmatpush2.msra.mxu0 0.0
    %519 = vmatprep.subr.mxu0 0.0
    %520 = vmatpush2.msra.mxu0 0.0
    %521 = vmatprep.subr.mxu0 0.0
    %522 = vmatpush2.msra.mxu0 0.0
    %523 = vmatprep.subr.mxu0 0.0
    %524 = vmatpush2.msra.mxu0 0.0
    %525 = vmatprep.subr.mxu0 0.0
    %526 = vmatpush2.msra.mxu0 0.0
    %527 = vmatprep.subr.mxu0 0.0
    %528 = vmatpush2.msra.mxu0 0.0
    %529 = vmatprep.mubr.f32.mxu0 0.0
    %530 = vmatmul.mubr.f32.gmra.mxu0 %v460
    %v531 = vpop.f32.mrf.mxu0
    %v532 = vadd.f32 %v118, %v531
    %v533 = vpop.f32.mrf.mxu0
    %534 = vmatprep.mubr.f32.mxu0 0.0
    %535 = vmatmul.mubr.f32.gmra.mxu0 %v463
    %v536 = vpop.f32.mrf.mxu0
    %v537 = vadd.f32 %v118, %v536
    %v538 = vpop.f32.mrf.mxu0
    %539 = vdwg.mxu0
    %v540 = vmax.f32 %v532, 0.0
    %v541 = vmax.f32 %v537, 0.0
    %v542 = vsel %vm204, %v540, -inf
    %v543 = vsel %vm206, %v541, -inf
    %v544 = vmax.f32 %v542, %v543
    %v545 = vrot.slane %v544, 4
    %v546 = vmax.f32 %v544, %v545
    %v547 = vrot.slane %v546, 2
    %v548 = vmax.f32 %v546, %v547
    %v549 = vrot.slane %v548, 1
    %v550 = vmax.f32 %v548, %v549
    %v551 = vrot.slane %v433, 3
    %v552 = vrot.slane %v434, 3
    %v553 = vsel %vm215, %v551, %v552
    %554 = vrot.lane.b32.xlu0 %v553, 96
    %v555 = vpop.permute.xlu0 %554
    %556 = vrot.lane.b32.xlu0 %v552, 96
    %v557 = vpop.permute.xlu0 %556
    %v560 = vsel %vm120, %v457, %v555
    %v561 = vsel %vm120, %v458, %v557
    %562 = vmatprep.subr.mxu0 0.0
    %563 = vmatpush1.msra.mxu0 %v61
    %564 = vmatprep.subr.mxu0 0.0
    %565 = vmatpush1.msra.mxu0 %v60
    %566 = vmatprep.subr.mxu0 0.0
    %567 = vmatpush1.msra.mxu0 %v59
    %568 = vmatprep.subr.mxu0 0.0
    %569 = vmatpush1.msra.mxu0 %v58
    %570 = vmatprep.subr.mxu0 0.0
    %571 = vmatpush1.msra.mxu0 %v57
    %572 = vmatprep.subr.mxu0 0.0
    %573 = vmatpush1.msra.mxu0 %v56
    %574 = vmatprep.subr.mxu0 0.0
    %575 = vmatpush1.msra.mxu0 %v55
    %576 = vmatprep.subr.mxu0 0.0
    %577 = vmatpush1.msra.mxu0 %v54
    %578 = vmatprep.subr.mxu0 0.0
    %579 = vmatpush1.msra.mxu0 %v53
    %580 = vmatprep.subr.mxu0 0.0
    %581 = vmatpush1.msra.mxu0 %v52
    %582 = vmatprep.subr.mxu0 0.0
    %583 = vmatpush1.msra.mxu0 %v51
    %584 = vmatprep.subr.mxu0 0.0
    %585 = vmatpush1.msra.mxu0 %v50
    %586 = vmatprep.subr.mxu0 0.0
    %587 = vmatpush1.msra.mxu0 %v49
    %588 = vmatprep.subr.mxu0 0.0
    %589 = vmatpush1.msra.mxu0 %v48
    %590 = vmatprep.subr.mxu0 0.0
    %591 = vmatpush1.msra.mxu0 %v47
    %592 = vmatprep.subr.mxu0 0.0
    %593 = vmatpush1.msra.mxu0 %v46
    %594 = vmatprep.subr.mxu0 0.0
    %595 = vmatpush2.msra.mxu0 0.0
    %596 = vmatprep.subr.mxu0 0.0
    %597 = vmatpush2.msra.mxu0 0.0
    %598 = vmatprep.subr.mxu0 0.0
    %599 = vmatpush2.msra.mxu0 0.0
    %600 = vmatprep.subr.mxu0 0.0
    %601 = vmatpush2.msra.mxu0 0.0
    %602 = vmatprep.subr.mxu0 0.0
    %603 = vmatpush2.msra.mxu0 0.0
    %604 = vmatprep.subr.mxu0 0.0
    %605 = vmatpush2.msra.mxu0 0.0
    %606 = vmatprep.subr.mxu0 0.0
    %607 = vmatpush2.msra.mxu0 0.0
    %608 = vmatprep.subr.mxu0 0.0
    %609 = vmatpush2.msra.mxu0 0.0
    %610 = vmatprep.subr.mxu0 0.0
    %611 = vmatpush2.msra.mxu0 0.0
    %612 = vmatprep.subr.mxu0 0.0
    %613 = vmatpush2.msra.mxu0 0.0
    %614 = vmatprep.subr.mxu0 0.0
    %615 = vmatpush2.msra.mxu0 0.0
    %616 = vmatprep.subr.mxu0 0.0
    %617 = vmatpush2.msra.mxu0 0.0
    %618 = vmatprep.subr.mxu0 0.0
    %619 = vmatpush2.msra.mxu0 0.0
    %620 = vmatprep.subr.mxu0 0.0
    %621 = vmatpush2.msra.mxu0 0.0
    %622 = vmatprep.subr.mxu0 0.0
    %623 = vmatpush2.msra.mxu0 0.0
    %624 = vmatprep.subr.mxu0 0.0
    %625 = vmatpush2.msra.mxu0 0.0
    %626 = vmatprep.mubr.f32.mxu0 0.0
    %627 = vmatmul.mubr.f32.gmra.mxu0 %v560
    %v628 = vpop.f32.mrf.mxu0
    %v629 = vadd.f32 %v231, %v628
    %v630 = vpop.f32.mrf.mxu0
    %631 = vmatprep.mubr.f32.mxu0 0.0
    %632 = vmatmul.mubr.f32.gmra.mxu0 %v561
    %v633 = vpop.f32.mrf.mxu0
    %v634 = vadd.f32 %v231, %v633
    %v635 = vpop.f32.mrf.mxu0
    %636 = vdwg.mxu0
    %v637 = vmax.f32 %v629, 0.0
    %v638 = vmax.f32 %v634, 0.0
    %v639 = vsel %vm204, %v637, -inf
    %v640 = vsel %vm311, %v638, -inf
    %v641 = vmax.f32 %v639, %v640
    %v642 = vrot.slane %v641, 4
    %v643 = vmax.f32 %v641, %v642
    %v644 = vrot.slane %v643, 2
    %v645 = vmax.f32 %v643, %v644
    %v646 = vrot.slane %v645, 1
    %v647 = vmax.f32 %v645, %v646
    %v648 = vrot.slane %v433, 4
    %v649 = vrot.slane %v434, 4
    %v650 = vsel %vm320, %v648, %v649
    %v651 = vsel %vm108, %v650, 0
    %v653 = vsel %vm108, %v649, 0
    %655 = vmatprep.subr.mxu0 0.0
    %656 = vmatpush1.msra.mxu0 %v78
    %657 = vmatprep.subr.mxu0 0.0
    %658 = vmatpush1.msra.mxu0 %v77
    %659 = vmatprep.subr.mxu0 0.0
    %660 = vmatpush1.msra.mxu0 %v76
    %661 = vmatprep.subr.mxu0 0.0
    %662 = vmatpush1.msra.mxu0 %v75
    %663 = vmatprep.subr.mxu0 0.0
    %664 = vmatpush1.msra.mxu0 %v74
    %665 = vmatprep.subr.mxu0 0.0
    %666 = vmatpush1.msra.mxu0 %v73
    %667 = vmatprep.subr.mxu0 0.0
    %668 = vmatpush1.msra.mxu0 %v72
    %669 = vmatprep.subr.mxu0 0.0
    %670 = vmatpush1.msra.mxu0 %v71
    %671 = vmatprep.subr.mxu0 0.0
    %672 = vmatpush1.msra.mxu0 %v70
    %673 = vmatprep.subr.mxu0 0.0
    %674 = vmatpush1.msra.mxu0 %v69
    %675 = vmatprep.subr.mxu0 0.0
    %676 = vmatpush1.msra.mxu0 %v68
    %677 = vmatprep.subr.mxu0 0.0
    %678 = vmatpush1.msra.mxu0 %v67
    %679 = vmatprep.subr.mxu0 0.0
    %680 = vmatpush1.msra.mxu0 %v66
    %681 = vmatprep.subr.mxu0 0.0
    %682 = vmatpush1.msra.mxu0 %v65
    %683 = vmatprep.subr.mxu0 0.0
    %684 = vmatpush1.msra.mxu0 %v64
    %685 = vmatprep.subr.mxu0 0.0
    %686 = vmatpush1.msra.mxu0 %v63
    %687 = vmatprep.subr.mxu0 0.0
    %688 = vmatpush2.msra.mxu0 0.0
    %689 = vmatprep.subr.mxu0 0.0
    %690 = vmatpush2.msra.mxu0 0.0
    %691 = vmatprep.subr.mxu0 0.0
    %692 = vmatpush2.msra.mxu0 0.0
    %693 = vmatprep.subr.mxu0 0.0
    %694 = vmatpush2.msra.mxu0 0.0
    %695 = vmatprep.subr.mxu0 0.0
    %696 = vmatpush2.msra.mxu0 0.0
    %697 = vmatprep.subr.mxu0 0.0
    %698 = vmatpush2.msra.mxu0 0.0
    %699 = vmatprep.subr.mxu0 0.0
    %700 = vmatpush2.msra.mxu0 0.0
    %701 = vmatprep.subr.mxu0 0.0
    %702 = vmatpush2.msra.mxu0 0.0
    %703 = vmatprep.subr.mxu0 0.0
    %704 = vmatpush2.msra.mxu0 0.0
    %705 = vmatprep.subr.mxu0 0.0
    %706 = vmatpush2.msra.mxu0 0.0
    %707 = vmatprep.subr.mxu0 0.0
    %708 = vmatpush2.msra.mxu0 0.0
    %709 = vmatprep.subr.mxu0 0.0
    %710 = vmatpush2.msra.mxu0 0.0
    %711 = vmatprep.subr.mxu0 0.0
    %712 = vmatpush2.msra.mxu0 %v82
    %713 = vmatprep.subr.mxu0 0.0
    %714 = vmatpush2.msra.mxu0 %v81
    %715 = vmatprep.subr.mxu0 0.0
    %716 = vmatpush2.msra.mxu0 %v80
    %717 = vmatprep.subr.mxu0 0.0
    %718 = vmatpush2.msra.mxu0 %v79
    %719 = vmatprep.mubr.f32.mxu0 %v651
    %720 = vmatmul.mubr.f32.gmra.mxu0 %v560
    %v721 = vpop.f32.mrf.mxu0
    %v722 = vadd.f32 %v328, %v721
    %v723 = vpop.f32.mrf.mxu0
    %724 = vmatprep.mubr.f32.mxu0 %v653
    %725 = vmatmul.mubr.f32.gmra.mxu0 %v561
    %v726 = vpop.f32.mrf.mxu0
    %v727 = vadd.f32 %v328, %v726
    %v728 = vpop.f32.mrf.mxu0
    %729 = vdwg.mxu0
    %v730 = vmax.f32 %v722, 0.0
    %v731 = vmax.f32 %v727, 0.0
    %v732 = vsel %vm204, %v730, -inf
    %v733 = vsel %vm412, %v731, -inf
    %v734 = vmax.f32 %v732, %v733
    %v735 = vrot.slane %v734, 4
    %v736 = vmax.f32 %v734, %v735
    %v737 = vrot.slane %v736, 2
    %v738 = vmax.f32 %v736, %v737
    %v739 = vrot.slane %v738, 1
    %v740 = vmax.f32 %v738, %v739
    %742 = vrot.lane.b32.xlu0 %v647, 8
    %v743 = vpop.permute.xlu0 %742
    %746 = vrot.lane.b32.xlu0 %v740, 16
    %v747 = vpop.permute.xlu0 %746
    %v749 = vsel %vm204, %v550, %v743
    %v750 = vsel %vm430, %v749, %v747
    %v752 = vrot.slane %v750, 7
    %vm754 = vcmask 1040384
    %v755 = vsel %vm754, %v431, %v752
    %v756 = vld [vmem:[%s7] sm:$0xff]
    %v757 = vld [vmem:[%s7 + $0x8] sm:$0xff]
    %v758 = vld [vmem:[%s7 + $0x10] sm:$0xff]
    %v759 = vld [vmem:[%s8] sm:$0x1]
    %v761 = vlaneseq
    %v762 = vshrl.u32 %v761, 7
    %v763 = vsub.s32 0, %v762
    %v764 = vrot.slane %v759, %v763
    %vm766 = vcmask 195584
    %v768 = vsel %vm766, %v755, 0
    %770 = vmatprep.subr.mxu0 0.0
    %771 = vmatpush1.msra.mxu0 0.0
    %772 = vmatprep.subr.mxu0 0.0
    %773 = vmatpush1.msra.mxu0 0.0
    %774 = vmatprep.subr.mxu0 0.0
    %775 = vmatpush1.msra.mxu0 0.0
    %776 = vmatprep.subr.mxu0 0.0
    %777 = vmatpush1.msra.mxu0 0.0
    %778 = vmatprep.subr.mxu0 0.0
    %779 = vmatpush1.msra.mxu0 0.0
    %780 = vmatprep.subr.mxu0 0.0
    %781 = vmatpush1.msra.mxu0 0.0
    %782 = vmatprep.subr.mxu0 0.0
    %783 = vmatpush1.msra.mxu0 0.0
    %784 = vmatprep.subr.mxu0 0.0
    %785 = vmatpush1.msra.mxu0 0.0
    %786 = vmatprep.subr.mxu0 0.0
    %787 = vmatpush1.msra.mxu0 0.0
    %788 = vmatprep.subr.mxu0 0.0
    %789 = vmatpush1.msra.mxu0 0.0
    %790 = vmatprep.subr.mxu0 0.0
    %791 = vmatpush1.msra.mxu0 0.0
    %792 = vmatprep.subr.mxu0 0.0
    %793 = vmatpush1.msra.mxu0 0.0
    %794 = vmatprep.subr.mxu0 0.0
    %795 = vmatpush1.msra.mxu0 0.0
    %796 = vmatprep.subr.mxu0 0.0
    %797 = vmatpush1.msra.mxu0 %v758
    %798 = vmatprep.subr.mxu0 0.0
    %799 = vmatpush1.msra.mxu0 %v757
    %800 = vmatprep.subr.mxu0 0.0
    %801 = vmatpush1.msra.mxu0 %v756
    %802 = vmatprep.subr.mxu0 0.0
    %803 = vmatpush2.msra.mxu0 0.0
    %804 = vmatprep.subr.mxu0 0.0
    %805 = vmatpush2.msra.mxu0 0.0
    %806 = vmatprep.subr.mxu0 0.0
    %807 = vmatpush2.msra.mxu0 0.0
    %808 = vmatprep.subr.mxu0 0.0
    %809 = vmatpush2.msra.mxu0 0.0
    %810 = vmatprep.subr.mxu0 0.0
    %811 = vmatpush2.msra.mxu0 0.0
    %812 = vmatprep.subr.mxu0 0.0
    %813 = vmatpush2.msra.mxu0 0.0
    %814 = vmatprep.subr.mxu0 0.0
    %815 = vmatpush2.msra.mxu0 0.0
    %816 = vmatprep.subr.mxu0 0.0
    %817 = vmatpush2.msra.mxu0 0.0
    %818 = vmatprep.subr.mxu0 0.0
    %819 = vmatpush2.msra.mxu0 0.0
    %820 = vmatprep.subr.mxu0 0.0
    %821 = vmatpush2.msra.mxu0 0.0
    %822 = vmatprep.subr.mxu0 0.0
    %823 = vmatpush2.msra.mxu0 0.0
    %824 = vmatprep.subr.mxu0 0.0
    %825 = vmatpush2.msra.mxu0 0.0
    %826 = vmatprep.subr.mxu0 0.0
    %827 = vmatpush2.msra.mxu0 0.0
    %828 = vmatprep.subr.mxu0 0.0
    %829 = vmatpush2.msra.mxu0 0.0
    %830 = vmatprep.subr.mxu0 0.0
    %831 = vmatpush2.msra.mxu0 0.0
    %832 = vmatprep.subr.mxu0 0.0
    %833 = vmatpush2.msra.mxu0 0.0
    %834 = vmatprep.mubr.f32.mxu0 0.0
    %835 = vmatmul.mubr.f32.gmra.mxu0 %v768
    %v836 = vpop.f32.mrf.mxu0
    %v837 = vadd.f32 %v764, %v836
    %v838 = vpop.f32.mrf.mxu0
    %839 = vdwg.mxu0
    %vm840 = vcmask 74752
    %841 = vst.msk [vmem:[#allocation2] sm:$0x3] %vm840, %v837
    // Predicated region
    $region38: #{tpu_custom_call.1} parent=1 // pred_check
      _
    $region39: #{tpu_custom_call.1} parent=1 // pred_check_branch
      %843 = sbr.rel (0) target = $region41
    $region40: #{tpu_custom_call.1} parent=1 // pred_region
      %s845 = ssub.s32 32, 32
      %846 = vsyncadd [#allocation3], %s845
      %s848 = sshll.u32 [#allocation2], 4
      %s849 = int_to_ptr.vmem [resolvable:$true] %s848
      %851 = dma.vmem_to_hbm [thread:$0]  %s849, 32, %s9, [#allocation3]
    $region41: #{tpu_custom_call.1} parent=1 // pred_fallthru
      _
    // Predicated region
    $region42: #{tpu_custom_call.1} parent=1 // pred_check
      _
    $region43: #{tpu_custom_call.1} parent=1 // pred_check_branch
      %853 = sbr.rel (0) target = $region45
    $region44: #{tpu_custom_call.1} parent=1 // pred_region
      %854 = dma.done [#allocation3], 32
    $region45: #{tpu_custom_call.1} parent=1 // pred_fallthru
      _
    %855 = vsyncpa [#allocation3], 1

</llo_original>
